<compile_context>
chip_gen: v7x
topology: tpu7x:2x2x1
jax: 0.10.0
libtpu: 0.0.40
codegen_flags: <defaults>
</compile_context>

<pallas_src>
import functools

import jax
import jax.numpy as jnp
from jax.experimental import pallas as pl
from jax.experimental.pallas import tpu as pltpu

LANE = 128
SUBLANE = 8


def _dice_bce_kernel(x_ref, t_ref, acc_ref, *, n_valid, tile_rows):
    # acc_ref: (4, 8, 128) resident accumulator for this core's grid slice.
    #   [0]=sum(p*t), [1]=sum(p), [2]=sum(t), [3]=sum(bce terms)
    @pl.when(pl.program_id(1) == 0)
    def _():
        acc_ref[...] = jnp.zeros_like(acc_ref)

    x = x_ref[...].astype(jnp.float32)
    t = t_ref[...].astype(jnp.float32)

    # Validity mask built in-kernel (replaces a third full-size HBM stream).
    # NOTE: int32 flat index -> fine for < 2**31 elements.
    step = pl.program_id(0) * pl.num_programs(1) + pl.program_id(1)
    row_ids = jax.lax.broadcasted_iota(jnp.int32, (tile_rows, LANE), 0)
    lane_ids = jax.lax.broadcasted_iota(jnp.int32, (tile_rows, LANE), 1)
    flat_idx = (step * tile_rows + row_ids) * LANE + lane_ids
    valid = flat_idx < n_valid

    # sigmoid + logits-form BCE sharing one exp (short EUP chain):
    #   p   = sigmoid(x)
    #   bce = -(t*log(p) + (1-t)*log(1-p)) = max(x,0) - x*t + log(1 + exp(-|x|))
    e = jnp.exp(-jnp.abs(x))
    inv = 1.0 / (1.0 + e)
    p = jnp.where(x >= 0.0, inv, e * inv)
    bce = jnp.maximum(x, 0.0) - x * t + jnp.log(1.0 + e)

    zero = jnp.zeros_like(x)
    pt = jnp.where(valid, p * t, zero)
    ps = jnp.where(valid, p, zero)
    ts = jnp.where(valid, t, zero)
    bs = jnp.where(valid, bce, zero)

    # (tile_rows, 128) -> (8, 128): layout-preserving reshape + adds over the
    # leading axis (pure VPU, no XLU); keeps the resident accumulator fixed.
    def red(v):
        return v.reshape(tile_rows // SUBLANE, SUBLANE, LANE).sum(axis=0)

    acc_ref[0] += red(pt)
    acc_ref[1] += red(ps)
    acc_ref[2] += red(ts)
    acc_ref[3] += red(bs)


def dice_bce_loss(inputs, targets, smooth=1.0, *, tile_rows=1024, num_cores=2):
    # Keep the (possibly narrow) floating input dtype on the HBM side and cast
    # to f32 in-kernel; only promote non-float targets (bool / int).
    if not jnp.issubdtype(targets.dtype, jnp.floating):
        targets = targets.astype(jnp.float32)
    x = inputs.reshape(-1)
    t = targets.reshape(-1)
    n = x.shape[0]

    # (rows, 128) slab; rows a multiple of 8 and of num_cores * tile_rows.
    rows = -(-n // LANE)
    rows = -(-rows // SUBLANE) * SUBLANE
    tile_rows = min(tile_rows, rows)          # rows, tile_rows: multiples of 8
    chunk = num_cores * tile_rows
    rows_p = -(-rows // chunk) * chunk
    steps_per_core = rows_p // chunk
    pad = rows_p * LANE - n

    xp = jnp.pad(x, (0, pad)).reshape(rows_p, LANE)
    tp = jnp.pad(t, (0, pad)).reshape(rows_p, LANE)

    kernel = functools.partial(_dice_bce_kernel, n_valid=n, tile_rows=tile_rows)

    in_spec = pl.BlockSpec(
        (tile_rows, LANE), lambda c, i: (c * steps_per_core + i, 0)
    )
    acc = pl.pallas_call(
        kernel,
        out_shape=jax.ShapeDtypeStruct((num_cores, 4, SUBLANE, LANE), jnp.float32),
        grid=(num_cores, steps_per_core),
        in_specs=[in_spec, in_spec],
        out_specs=pl.BlockSpec(
            (None, 4, SUBLANE, LANE), lambda c, i: (c, 0, 0, 0)
        ),
        compiler_params=pltpu.CompilerParams(
            dimension_semantics=("parallel", "arbitrary"),
        ),
    )(xp, tp)

    # (num_cores, 4, 8, 128) -> per-quantity scalars.
    sums = acc.sum(axis=(0, 2, 3))
    intersection, p_sum, t_sum, bce_sum = sums[0], sums[1], sums[2], sums[3]

    dice_loss = 1.0 - (2.0 * intersection + smooth) / (p_sum + t_sum + smooth)
    bce = bce_sum / n
    return bce + dice_loss


def _reference(inputs, targets, smooth=1.0):
    # Torch-faithful: sigmoid, then binary_cross_entropy (logs clamped at -100).
    p = jax.nn.sigmoid(inputs.reshape(-1).astype(jnp.float32))
    t = targets.reshape(-1).astype(jnp.float32)
    intersection = jnp.sum(p * t)
    dice = 1.0 - (2.0 * intersection + smooth) / (jnp.sum(p) + jnp.sum(t) + smooth)
    bce = jnp.mean(
        -(t * jnp.maximum(jnp.log(p), -100.0)
          + (1.0 - t) * jnp.maximum(jnp.log(1.0 - p), -100.0))
    )
    return bce + dice


if __name__ == "__main__":
    key = jax.random.PRNGKey(0)
    k1, k2 = jax.random.split(key)
    # NCHW logits and binary targets, as a segmentation loss would see them.
    inputs = jax.random.normal(k1, (2, 4, 16, 16), dtype=jnp.float32)
    targets = (jax.random.uniform(k2, (2, 4, 16, 16)) > 0.5).astype(jnp.float32)

    loss = jax.block_until_ready(dice_bce_loss(inputs, targets))
    ref = jax.block_until_ready(_reference(inputs, targets))
    assert jnp.allclose(loss, ref, atol=1e-5, rtol=1e-5), (loss, ref)
    print("KERNEL_OK")
</pallas_src>

<mosaic_0001>
module attributes {stable_mosaic.version = 11 : i64} {
  func.func @_dice_bce_kernel(%arg0: i32, %arg1: i32, %arg2: memref<16x128xf32, #tpu.memory_space<vmem>>, %arg3: memref<16x128xf32, #tpu.memory_space<vmem>>, %arg4: memref<1x4x8x128xf32, #tpu.memory_space<vmem>>) attributes {dimension_semantics = [#tpu.dimension_semantics<parallel>, #tpu.dimension_semantics<arbitrary>], iteration_bounds = array<i64: 2, 1>, scalar_prefetch = 0 : i64, scratch_operands = 0 : i64, tpu.core_type = #tpu.core_type<tc>, window_params = [{transform_indices = @transform_0, window_bounds = array<i64: 16, 128>}, {transform_indices = @transform_1, window_bounds = array<i64: 16, 128>}, {transform_indices = @transform_2, window_bounds = array<i64: 1, 4, 8, 128>}]} {
    %c0_i32 = arith.constant 0 : i32
    %0 = arith.cmpi eq, %arg1, %c0_i32 : i32
    %1 = arith.extui %0 : i1 to i32
    %c0_i32_0 = arith.constant 0 : i32
    %2 = arith.cmpi ne, %1, %c0_i32_0 : i32
    scf.if %2 {
      %cst_43 = arith.constant 0.000000e+00 : f32
      %75 = vector.broadcast %cst_43 : f32 to vector<4x8x128xf32>
      %c0_44 = arith.constant 0 : index
      %c0_45 = arith.constant 0 : index
      %c0_46 = arith.constant 0 : index
      %c0_47 = arith.constant 0 : index
      %76 = vector.load %arg4[%c0_44, %c0_45, %c0_46, %c0_47] : memref<1x4x8x128xf32, #tpu.memory_space<vmem>>, vector<1x4x8x128xf32>
      %77 = vector.shape_cast %76 : vector<1x4x8x128xf32> to vector<4x8x128xf32>
      %78 = vector.shape_cast %75 : vector<4x8x128xf32> to vector<1x4x8x128xf32>
      tpu.vector_store %arg4[%c0_44, %c0_45, %c0_46, %c0_47], %78 {strides = array<i32>} : memref<1x4x8x128xf32, #tpu.memory_space<vmem>>, vector<1x4x8x128xf32>,
    } else {
    }
    %c0 = arith.constant 0 : index
    %c0_1 = arith.constant 0 : index
    %3 = vector.load %arg2[%c0, %c0_1] : memref<16x128xf32, #tpu.memory_space<vmem>>, vector<16x128xf32>
    %c0_2 = arith.constant 0 : index
    %c0_3 = arith.constant 0 : index
    %4 = vector.load %arg3[%c0_2, %c0_3] : memref<16x128xf32, #tpu.memory_space<vmem>>, vector<16x128xf32>
    %c1_i32 = arith.constant 1 : i32
    %5 = arith.muli %arg0, %c1_i32 : i32
    %6 = arith.addi %5, %arg1 : i32
    %7 = tpu.iota {dimensions = array<i32: 0>} : vector<16x128xi32>
    %8 = tpu.iota {dimensions = array<i32: 1>} : vector<16x128xi32>
    %c16_i32 = arith.constant 16 : i32
    %9 = arith.muli %6, %c16_i32 : i32
    %10 = vector.broadcast %9 : i32 to vector<16x128xi32>
    %11 = arith.addi %10, %7 : vector<16x128xi32>
    %c128_i32 = arith.constant 128 : i32
    %12 = vector.broadcast %c128_i32 : i32 to vector<16x128xi32>
    %13 = arith.muli %11, %12 : vector<16x128xi32>
    %14 = arith.addi %13, %8 : vector<16x128xi32>
    %c2048_i32 = arith.constant 2048 : i32
    %15 = vector.broadcast %c2048_i32 : i32 to vector<16x128xi32>
    %16 = arith.cmpi slt, %14, %15 : vector<16x128xi32>
    %17 = math.absf %3 : vector<16x128xf32>
    %cst = arith.constant 0.000000e+00 : f32
    %18 = vector.broadcast %cst : f32 to vector<16x128xf32>
    %19 = arith.subf %18, %17 : vector<16x128xf32>
    %20 = math.exp %19 : vector<16x128xf32>
    %cst_4 = arith.constant 1.000000e+00 : f32
    %21 = vector.broadcast %cst_4 : f32 to vector<16x128xf32>
    %22 = arith.addf %21, %20 : vector<16x128xf32>
    %cst_5 = arith.constant 1.000000e+00 : f32
    %23 = vector.broadcast %cst_5 : f32 to vector<16x128xf32>
    %24 = arith.divf %23, %22 : vector<16x128xf32>
    %cst_6 = arith.constant 0.000000e+00 : f32
    %25 = vector.broadcast %cst_6 : f32 to vector<16x128xf32>
    %26 = arith.cmpf oge, %3, %25 : vector<16x128xf32>
    %27 = arith.mulf %20, %24 : vector<16x128xf32>
    %28 = arith.select %26, %24, %27 : vector<16x128xi1>, vector<16x128xf32>
    %cst_7 = arith.constant 0.000000e+00 : f32
    %29 = vector.broadcast %cst_7 : f32 to vector<16x128xf32>
    %30 = arith.maximumf %3, %29 : vector<16x128xf32>
    %31 = arith.mulf %3, %4 : vector<16x128xf32>
    %32 = arith.subf %30, %31 : vector<16x128xf32>
    %cst_8 = arith.constant 1.000000e+00 : f32
    %33 = vector.broadcast %cst_8 : f32 to vector<16x128xf32>
    %34 = arith.addf %33, %20 : vector<16x128xf32>
    %35 = math.log %34 : vector<16x128xf32>
    %36 = arith.addf %32, %35 : vector<16x128xf32>
    %cst_9 = arith.constant 0.000000e+00 : f32
    %37 = vector.broadcast %cst_9 : f32 to vector<16x128xf32>
    %38 = arith.mulf %28, %4 : vector<16x128xf32>
    %39 = arith.select %16, %38, %37 : vector<16x128xi1>, vector<16x128xf32>
    %40 = arith.select %16, %28, %37 : vector<16x128xi1>, vector<16x128xf32>
    %41 = arith.select %16, %4, %37 : vector<16x128xi1>, vector<16x128xf32>
    %42 = arith.select %16, %36, %37 : vector<16x128xi1>, vector<16x128xf32>
    %c0_10 = arith.constant 0 : index
    %c0_11 = arith.constant 0 : index
    %c0_12 = arith.constant 0 : index
    %c0_13 = arith.constant 0 : index
    %43 = vector.load %arg4[%c0_10, %c0_11, %c0_12, %c0_13] : memref<1x4x8x128xf32, #tpu.memory_space<vmem>>, vector<1x1x8x128xf32>
    %44 = vector.shape_cast %43 : vector<1x1x8x128xf32> to vector<8x128xf32>
    %45 = vector.shape_cast %39 : vector<16x128xf32> to vector<2x8x128xf32>
    %cst_14 = arith.constant dense<0.000000e+00> : vector<8x128xf32>
    %46 = vector.multi_reduction <add>, %45, %cst_14 [0] : vector<2x8x128xf32> to vector<8x128xf32>
    %47 = arith.addf %44, %46 : vector<8x128xf32>
    %c0_15 = arith.constant 0 : index
    %c0_16 = arith.constant 0 : index
    %c0_17 = arith.constant 0 : index
    %c0_18 = arith.constant 0 : index
    %48 = vector.load %arg4[%c0_15, %c0_16, %c0_17, %c0_18] : memref<1x4x8x128xf32, #tpu.memory_space<vmem>>, vector<1x1x8x128xf32>
    %49 = vector.shape_cast %48 : vector<1x1x8x128xf32> to vector<8x128xf32>
    %50 = vector.shape_cast %47 : vector<8x128xf32> to vector<1x1x8x128xf32>
    tpu.vector_store %arg4[%c0_15, %c0_16, %c0_17, %c0_18], %50 {strides = array<i32>} : memref<1x4x8x128xf32, #tpu.memory_space<vmem>>, vector<1x1x8x128xf32>,
    %c0_19 = arith.constant 0 : index
    %c1 = arith.constant 1 : index
    %c0_20 = arith.constant 0 : index
    %c0_21 = arith.constant 0 : index
    %51 = vector.load %arg4[%c0_19, %c1, %c0_20, %c0_21] : memref<1x4x8x128xf32, #tpu.memory_space<vmem>>, vector<1x1x8x128xf32>
    %52 = vector.shape_cast %51 : vector<1x1x8x128xf32> to vector<8x128xf32>
    %53 = vector.shape_cast %40 : vector<16x128xf32> to vector<2x8x128xf32>
    %cst_22 = arith.constant dense<0.000000e+00> : vector<8x128xf32>
    %54 = vector.multi_reduction <add>, %53, %cst_22 [0] : vector<2x8x128xf32> to vector<8x128xf32>
    %55 = arith.addf %52, %54 : vector<8x128xf32>
    %c0_23 = arith.constant 0 : index
    %c1_24 = arith.constant 1 : index
    %c0_25 = arith.constant 0 : index
    %c0_26 = arith.constant 0 : index
    %56 = vector.load %arg4[%c0_23, %c1_24, %c0_25, %c0_26] : memref<1x4x8x128xf32, #tpu.memory_space<vmem>>, vector<1x1x8x128xf32>
    %57 = vector.shape_cast %56 : vector<1x1x8x128xf32> to vector<8x128xf32>
    %58 = vector.shape_cast %55 : vector<8x128xf32> to vector<1x1x8x128xf32>
    tpu.vector_store %arg4[%c0_23, %c1_24, %c0_25, %c0_26], %58 {strides = array<i32>} : memref<1x4x8x128xf32, #tpu.memory_space<vmem>>, vector<1x1x8x128xf32>,
    %c0_27 = arith.constant 0 : index
    %c2 = arith.constant 2 : index
    %c0_28 = arith.constant 0 : index
    %c0_29 = arith.constant 0 : index
    %59 = vector.load %arg4[%c0_27, %c2, %c0_28, %c0_29] : memref<1x4x8x128xf32, #tpu.memory_space<vmem>>, vector<1x1x8x128xf32>
    %60 = vector.shape_cast %59 : vector<1x1x8x128xf32> to vector<8x128xf32>
    %61 = vector.shape_cast %41 : vector<16x128xf32> to vector<2x8x128xf32>
    %cst_30 = arith.constant dense<0.000000e+00> : vector<8x128xf32>
    %62 = vector.multi_reduction <add>, %61, %cst_30 [0] : vector<2x8x128xf32> to vector<8x128xf32>
    %63 = arith.addf %60, %62 : vector<8x128xf32>
    %c0_31 = arith.constant 0 : index
    %c2_32 = arith.constant 2 : index
    %c0_33 = arith.constant 0 : index
    %c0_34 = arith.constant 0 : index
    %64 = vector.load %arg4[%c0_31, %c2_32, %c0_33, %c0_34] : memref<1x4x8x128xf32, #tpu.memory_space<vmem>>, vector<1x1x8x128xf32>
    %65 = vector.shape_cast %64 : vector<1x1x8x128xf32> to vector<8x128xf32>
    %66 = vector.shape_cast %63 : vector<8x128xf32> to vector<1x1x8x128xf32>
    tpu.vector_store %arg4[%c0_31, %c2_32, %c0_33, %c0_34], %66 {strides = array<i32>} : memref<1x4x8x128xf32, #tpu.memory_space<vmem>>, vector<1x1x8x128xf32>,
    %c0_35 = arith.constant 0 : index
    %c3 = arith.constant 3 : index
    %c0_36 = arith.constant 0 : index
    %c0_37 = arith.constant 0 : index
    %67 = vector.load %arg4[%c0_35, %c3, %c0_36, %c0_37] : memref<1x4x8x128xf32, #tpu.memory_space<vmem>>, vector<1x1x8x128xf32>
    %68 = vector.shape_cast %67 : vector<1x1x8x128xf32> to vector<8x128xf32>
    %69 = vector.shape_cast %42 : vector<16x128xf32> to vector<2x8x128xf32>
    %cst_38 = arith.constant dense<0.000000e+00> : vector<8x128xf32>
    %70 = vector.multi_reduction <add>, %69, %cst_38 [0] : vector<2x8x128xf32> to vector<8x128xf32>
    %71 = arith.addf %68, %70 : vector<8x128xf32>
    %c0_39 = arith.constant 0 : index
    %c3_40 = arith.constant 3 : index
    %c0_41 = arith.constant 0 : index
    %c0_42 = arith.constant 0 : index
    %72 = vector.load %arg4[%c0_39, %c3_40, %c0_41, %c0_42] : memref<1x4x8x128xf32, #tpu.memory_space<vmem>>, vector<1x1x8x128xf32>
    %73 = vector.shape_cast %72 : vector<1x1x8x128xf32> to vector<8x128xf32>
    %74 = vector.shape_cast %71 : vector<8x128xf32> to vector<1x1x8x128xf32>
    tpu.vector_store %arg4[%c0_39, %c3_40, %c0_41, %c0_42], %74 {strides = array<i32>} : memref<1x4x8x128xf32, #tpu.memory_space<vmem>>, vector<1x1x8x128xf32>,
    return
  }
  func.func @transform_0(%arg0: i32, %arg1: i32) -> (i32, i32) {
    %c1_i32 = arith.constant 1 : i32
    %0 = arith.muli %arg0, %c1_i32 : i32
    %1 = arith.addi %0, %arg1 : i32
    %c0_i32 = arith.constant 0 : i32
    %c0_i32_0 = arith.constant 0 : i32
    return %1, %c0_i32 : i32, i32
  }
  func.func @transform_1(%arg0: i32, %arg1: i32) -> (i32, i32) {
    %c1_i32 = arith.constant 1 : i32
    %0 = arith.muli %arg0, %c1_i32 : i32
    %1 = arith.addi %0, %arg1 : i32
    %c0_i32 = arith.constant 0 : i32
    %c0_i32_0 = arith.constant 0 : i32
    return %1, %c0_i32 : i32, i32
  }
  func.func @transform_2(%arg0: i32, %arg1: i32) -> (i32, i32, i32, i32) {
    %c0_i32 = arith.constant 0 : i32
    %c0_i32_0 = arith.constant 0 : i32
    %c0_i32_1 = arith.constant 0 : i32
    %c0_i32_2 = arith.constant 0 : i32
    return %arg0, %c0_i32, %c0_i32_0, %c0_i32_1 : i32, i32, i32, i32
  }
}

</mosaic_0001>

<llo_original>
// kernel: tpu_custom_call.1
$region0: #{tpu_custom_call.1}
  #allocation0 [shape = 'u32[]', space=smem, size = 0x4, offset = 0x4, fixed_abs, tag = 'smem constant byte address 0x4 - core index']
  #allocation1 [shape = 'u32[144,128]{1,0:T(1,128)}', space=vmem, size = 0x12000, scoped, tag = 'internal scratch']
  %s0 = inlined_call_operand.hbm [shape: f32[32,128], index: 0, kind: input, shape index: {}]
  %s1 = inlined_call_operand.hbm [shape: f32[32,128], index: 1, kind: input, shape index: {}]
  %s2 = inlined_call_operand.hbm [shape: f32[2,4,8,128], index: 2, kind: output, shape index: {}]
  %s3 = sld [smem:[#allocation0]]
  $region53: #{tpu_custom_call.1} parent=0
    _
  %s5 = ssub.s32 1, %s3
  %s6 = scalar_select 0, %s5, %s3
  $region1: #{tpu_custom_call.1} parent=0
    #allocation2 [shape = 'u8[16384]{0}', space=vmem, size = 0x4000, scoped, tag = 'input window, operand 0']
    #allocation3 [shape = 's32[2]{0}', space=sflag, size = 0x8, scoped, tag = 'scoped memory for tpu_custom_call.1']
    #allocation4 [shape = 's32[2]{0}', space=sflag, size = 0x8, scoped, tag = 'scoped memory for tpu_custom_call.1']
    #allocation5 [shape = 'u8[16384]{0}', space=vmem, size = 0x4000, scoped, tag = 'input window, operand 1']
    #allocation6 [shape = 's32[2]{0}', space=sflag, size = 0x8, scoped, tag = 'scoped memory for tpu_custom_call.1']
    #allocation7 [shape = 'u8[32768]{0}', space=vmem, size = 0x8000, scoped, tag = 'output window, operand 0']
    %7 = vsyncpa [#allocation3], 0
    %s8 = scalar_lea.sflag [#allocation3], 1
    %9 = vsyncpa %s8, 0
    %10 = vsyncpa [#allocation6], 0
    %s11 = scalar_lea.sflag [#allocation6], 1
    %12 = vsyncpa %s11, 0
    %13 = vsyncpa [#allocation4], 0
    %s14 = scalar_lea.sflag [#allocation4], 1
    %15 = vsyncpa %s14, 0
    loop: start=0, step=1, limit=4
    $region2: #{tpu_custom_call.1} parent=1 // loop_pre_header
      _
    $region3: #{tpu_custom_call.1} parent=1 // loop_header
      %s17 = sphi 0, %s21
      %p18 = scmp.ge.s32.totalorder %s17, 4
      %s24 = sphi 0, %s36
      %s25 = sphi 0, %s32
      %s26 = sphi 0, %s24
      %s27 = sphi 0, %s25
      %s28 = sphi 0, %s26
      %s29 = sphi 0, %s27
      %s41 = sphi 0, %s43
      %s44 = sphi 0, %s41
      %s45 = sphi 0, %s44
      %s61 = sphi 0, %s45
      %s69 = sphi 0, %s71
      %s72 = sphi 0, %s69
      %s73 = sphi 0, %s72
      %s89 = sphi 0, %s73
      %s95 = sphi 0, %s97
      %s98 = sphi 0, %s95
      %s99 = sphi 0, %s98
      %s115 = sphi 0, %s99
    $region4: #{tpu_custom_call.1} parent=1 // loop_header_branch
      %20 = sbr.rel (%p18) target = $region8
    $region5: #{tpu_custom_call.1} parent=1 // loop_body
      %s22 = ssub.s32 %s17, 1
      %s23 = ssub.s32 %s17, 2
      %s30 = sadd.s32 1, %s25
      %p31 = scmp.ge.s32.totalorder %s30, 1
      %s32 = scalar_select %p31, 0, %s30
      %s33 = sadd.s32 1, %s24
      %s34 = scalar_select %p31, %s33, %s24
      %p35 = scmp.ge.s32.totalorder %s34, 2
      %s36 = scalar_select %p35, 0, %s34
      %s37 = sadd.s32 %s24, %s25
      %s38 = sadd.s32 %s36, %s32
      %s39 = ssub.s32 %s37, %s38
      %p40 = scmp.eq.s32.totalorder %s39, 0
      %s42 = sadd.s32 %s41, 1
      %s43 = scalar_select %p40, %s41, %s42
      %p46 = pneg %p40
      %p47 = scmp.eq.s32.totalorder %s17, 1
      %p48 = por %p46, %p47
      %p49 = scmp.ne.s32.totalorder %s41, %s44
      %p50 = scmp.eq.s32.totalorder %s17, 0
      %p51 = por %p49, %p50
      %p52 = scmp.ne.s32.totalorder %s41, %s44
      %p53 = scmp.eq.s32.totalorder %s22, 1
      %p54 = por %p52, %p53
      %p55 = scmp.ne.s32.totalorder %s44, %s45
      %p56 = scmp.eq.s32.totalorder %s22, 0
      %p57 = por %p55, %p56
      %p58 = scmp.ne.s32.totalorder %s44, %s45
      %p59 = scmp.eq.s32.totalorder %s23, 1
      %p60 = por %p58, %p59
      %p62 = scmp.ne.s32.totalorder %s45, %s61
      %p63 = scmp.eq.s32.totalorder %s23, 0
      %p64 = por %p62, %p63
      %s65 = sadd.s32 %s24, %s25
      %s66 = sadd.s32 %s36, %s32
      %s67 = ssub.s32 %s65, %s66
      %p68 = scmp.eq.s32.totalorder %s67, 0
      %s70 = sadd.s32 %s69, 1
      %s71 = scalar_select %p68, %s69, %s70
      %p74 = pneg %p68
      %p75 = scmp.eq.s32.totalorder %s17, 1
      %p76 = por %p74, %p75
      %p77 = scmp.ne.s32.totalorder %s69, %s72
      %p78 = scmp.eq.s32.totalorder %s17, 0
      %p79 = por %p77, %p78
      %p80 = scmp.ne.s32.totalorder %s69, %s72
      %p81 = scmp.eq.s32.totalorder %s22, 1
      %p82 = por %p80, %p81
      %p83 = scmp.ne.s32.totalorder %s72, %s73
      %p84 = scmp.eq.s32.totalorder %s22, 0
      %p85 = por %p83, %p84
      %p86 = scmp.ne.s32.totalorder %s72, %s73
      %p87 = scmp.eq.s32.totalorder %s23, 1
      %p88 = por %p86, %p87
      %p90 = scmp.ne.s32.totalorder %s73, %s89
      %p91 = scmp.eq.s32.totalorder %s23, 0
      %p92 = por %p90, %p91
      %s93 = ssub.s32 %s24, %s36
      %p94 = scmp.eq.s32.totalorder %s93, 0
      %s96 = sadd.s32 %s95, 1
      %s97 = scalar_select %p94, %s95, %s96
      %p100 = pneg %p94
      %p101 = scmp.eq.s32.totalorder %s17, 1
      %p102 = por %p100, %p101
      %p103 = scmp.ne.s32.totalorder %s95, %s98
      %p104 = scmp.eq.s32.totalorder %s17, 0
      %p105 = por %p103, %p104
      %p106 = scmp.ne.s32.totalorder %s95, %s98
      %p107 = scmp.eq.s32.totalorder %s22, 1
      %p108 = por %p106, %p107
      %p109 = scmp.ne.s32.totalorder %s98, %s99
      %p110 = scmp.eq.s32.totalorder %s22, 0
      %p111 = por %p109, %p110
      %p112 = scmp.ne.s32.totalorder %s98, %s99
      %p113 = scmp.eq.s32.totalorder %s23, 1
      %p114 = por %p112, %p113
      %p116 = scmp.ne.s32.totalorder %s99, %s115
      %p117 = scmp.eq.s32.totalorder %s23, 0
      %p118 = por %p116, %p117
      %p119 = scmp.le.s32.totalorder 1, %s17
      %p120 = scmp.lt.s32.totalorder %s17, 3
      %p121 = pnand %p119, %p120
      %p122 = pneg %p121
      // Predicated region
      $region9: #{tpu_custom_call.1} parent=5 // pred_check
        _
      $region10: #{tpu_custom_call.1} parent=5 // pred_check_branch
        %124 = sbr.rel (%p121) target = $region12
      $region11: #{tpu_custom_call.1} parent=5 // pred_region
        %s125 = ssub.s32 %s17, 1
      $region12: #{tpu_custom_call.1} parent=5 // pred_fallthru
        _
      %p126 = scmp.lt.s32.totalorder %s17, 2
      // Predicated region
      $region13: #{tpu_custom_call.1} parent=5 // pred_check
        %p127 = pneg %p126
      $region14: #{tpu_custom_call.1} parent=5 // pred_check_branch
        %129 = sbr.rel (%p127) target = $region16
      $region15: #{tpu_custom_call.1} parent=5 // pred_region
        // Predicated region
        $region17: #{tpu_custom_call.1} parent=15 // pred_check
          %p130 = pneg %p51
        $region18: #{tpu_custom_call.1} parent=15 // pred_check_branch
          %132 = sbr.rel (%p130) target = $region20
        $region19: #{tpu_custom_call.1} parent=15 // pred_region
          %s133 = sand.u32 %s41, 1
          %s134 = scalar_lea.sflag [#allocation3], %s133
          %s135 = sand.u32 %s41, 1
          %s136 = smul.addr %s135, 16
          %s137 = scalar_lea.vmem [#allocation2], %s136
          %s138 = sadd.s32 %s24, %s25
          %s139 = smul.u32 2, %s138
          %s141 = ssub.s32 256, 256
          %142 = vsyncadd %s134, %s141
          %s143 = smul.addr %s139, 128
          %s144 = scalar_lea.hbm %s0, %s143
          %s145 = sshll.u32 %s137, 4
          %s146 = int_to_ptr.vmem [resolvable:$true] %s145
          %151 = dma.hbm_to_vmem [thread:$0]  %s144, 256, %s146, %s134, 128, 128, 8
        $region20: #{tpu_custom_call.1} parent=15 // pred_fallthru
          _
        // Predicated region
        $region21: #{tpu_custom_call.1} parent=15 // pred_check
          %p152 = pneg %p79
        $region22: #{tpu_custom_call.1} parent=15 // pred_check_branch
          %154 = sbr.rel (%p152) target = $region24
        $region23: #{tpu_custom_call.1} parent=15 // pred_region
          %s155 = sand.u32 %s69, 1
          %s156 = scalar_lea.sflag [#allocation6], %s155
          %s157 = sand.u32 %s69, 1
          %s158 = smul.addr %s157, 16
          %s159 = scalar_lea.vmem [#allocation5], %s158
          %s160 = sadd.s32 %s24, %s25
          %s161 = smul.u32 2, %s160
          %s163 = ssub.s32 256, 256
          %164 = vsyncadd %s156, %s163
          %s165 = smul.addr %s161, 128
          %s166 = scalar_lea.hbm %s1, %s165
          %s167 = sshll.u32 %s159, 4
          %s168 = int_to_ptr.vmem [resolvable:$true] %s167
          %173 = dma.hbm_to_vmem [thread:$0]  %s166, 256, %s168, %s156, 128, 128, 8
        $region24: #{tpu_custom_call.1} parent=15 // pred_fallthru
          _
      $region16: #{tpu_custom_call.1} parent=5 // pred_fallthru
        _
      %p174 = scmp.le.s32.totalorder 1, %s17
      %p175 = scmp.lt.s32.totalorder %s17, 3
      %p176 = pnand %p174, %p175
      %p177 = pneg %p176
      // Predicated region
      $region25: #{tpu_custom_call.1} parent=5 // pred_check
        _
      $region26: #{tpu_custom_call.1} parent=5 // pred_check_branch
        %179 = sbr.rel (%p176) target = $region28
      $region27: #{tpu_custom_call.1} parent=5 // pred_region
        %s180 = ssub.s32 %s17, 1
        %s181 = sand.u32 %s44, 1
        %s182 = scalar_lea.sflag [#allocation3], %s181
        %s183 = sand.u32 %s44, 1
        %s184 = smul.addr %s183, 16
        %s185 = scalar_lea.vmem [#allocation2], %s184
        // Predicated region
        $region29: #{tpu_custom_call.1} parent=27 // pred_check
          %p186 = pneg %p57
        $region30: #{tpu_custom_call.1} parent=27 // pred_check_branch
          %188 = sbr.rel (%p186) target = $region32
        $region31: #{tpu_custom_call.1} parent=27 // pred_region
          %189 = dma.done %s182, 256
        $region32: #{tpu_custom_call.1} parent=27 // pred_fallthru
          _
        %s190 = sand.u32 %s72, 1
        %s191 = scalar_lea.sflag [#allocation6], %s190
        %s192 = sand.u32 %s72, 1
        %s193 = smul.addr %s192, 16
        %s194 = scalar_lea.vmem [#allocation5], %s193
        // Predicated region
        $region33: #{tpu_custom_call.1} parent=27 // pred_check
          %p195 = pneg %p85
        $region34: #{tpu_custom_call.1} parent=27 // pred_check_branch
          %197 = sbr.rel (%p195) target = $region36
        $region35: #{tpu_custom_call.1} parent=27 // pred_region
          %198 = dma.done %s191, 256
        $region36: #{tpu_custom_call.1} parent=27 // pred_fallthru
          _
        %s199 = sand.u32 %s44, 1
        %s200 = scalar_lea.sflag [#allocation3], %s199
        %s201 = sand.u32 %s44, 1
        %s202 = smul.addr %s201, 16
        %s203 = scalar_lea.vmem [#allocation2], %s202
        %p204 = pneg %p57
        %p205 = pneg %p54
        %s206 = sand.u32 %s72, 1
        %s207 = scalar_lea.sflag [#allocation6], %s206
        %s208 = sand.u32 %s72, 1
        %s209 = smul.addr %s208, 16
        %s210 = scalar_lea.vmem [#allocation5], %s209
        %p211 = pneg %p85
        %p212 = pneg %p82
        %p213 = pneg %p111
        %p214 = pneg %p108
        %s215 = sand.u32 %s98, 1
        %s216 = scalar_lea.sflag [#allocation4], %s215
        %s217 = sand.u32 %s98, 1
        %s218 = smul.addr %s217, 32
        %s219 = scalar_lea.vmem [#allocation7], %s218
        %s220 = sadd.s32 %s26, %s27
        %s221 = smul.u32 2, %s220
        %s222 = sadd.s32 %s26, %s27
        %s223 = smul.u32 2, %s222
        %p224 = scmp.eq.s32.totalorder %s27, 0
        // Predicated region
        $region37: #{tpu_custom_call.1} parent=27 // pred_check
          %p225 = pneg %p224
        $region38: #{tpu_custom_call.1} parent=27 // pred_check_branch
          %227 = sbr.rel (%p225) target = $region40
        $region39: #{tpu_custom_call.1} parent=27 // pred_region
          %228 = vst [vmem:[%s219] sm:$0xff] 0.0
          %229 = vst [vmem:[%s219 + $0x8] sm:$0xff] 0.0
          %230 = vst [vmem:[%s219 + $0x10] sm:$0xff] 0.0
          %231 = vst [vmem:[%s219 + $0x18] sm:$0xff] 0.0
        $region40: #{tpu_custom_call.1} parent=27 // pred_fallthru
          _
        %v232 = vld [vmem:[%s185] sm:$0xff]
        %v233 = vld [vmem:[%s185 + $0x8] sm:$0xff]
        %v234 = vld [vmem:[%s194] sm:$0xff]
        %v235 = vld [vmem:[%s194 + $0x8] sm:$0xff]
        %s236 = sadd.s32 %s26, %s27
        %v237 = vlaneseq
        %v238 = vshrl.u32 %v237, 7
        %v239 = vadd.s32 %v238, 8
        %v240 = vlaneseq
        %v241 = vand.u32 %v240, 127
        %s242 = smul.u32 %s236, 16
        %v243 = vstv %s242
        %v244 = vadd.s32 %v243, %v238
        %v245 = vadd.s32 %v243, %v239
        %v246 = vmul.u32 %v244, 128
        %v247 = vmul.u32 %v245, 128
        %v248 = vadd.s32 %v246, %v241
        %v249 = vadd.s32 %v247, %v241
        %vm250 = vcmp.lt.s32.totalorder %v248, 2048
        %vm251 = vcmp.lt.s32.totalorder %v249, 2048
        %v252 = vand.u32 2147483647, %v232
        %v253 = vand.u32 2147483647, %v233
        %v254 = vsub.f32 0.0, %v252
        %v255 = vsub.f32 0.0, %v253
        %v256 = vmul.f32 %v254, 1.442695
        %v257 = vpow.pop %v256
        %v258 = vmul.f32 %v255, 1.442695
        %v259 = vpow.pop %v258
        %v260 = vadd.f32 %v257, 1.0
        %v261 = vadd.f32 %v259, 1.0
        %v262 = vrcp.pop %v260
        %v263 = vmul.f32 1.0, %v262
        %v264 = vrcp.pop %v261
        %v265 = vmul.f32 1.0, %v264
        %vm266 = vcmp.ge.f32.partialorder %v232, 0.0
        %vm267 = vcmp.ge.f32.partialorder %v233, 0.0
        %v268 = vmul.f32 %v257, %v263
        %v269 = vmul.f32 %v259, %v265
        %v270 = vsel %vm266, %v263, %v268
        %v271 = vsel %vm267, %v265, %v269
        %v272 = vmax.f32 %v232, 0.0
        %v273 = vmax.f32 %v233, 0.0
        %v274 = vmul.f32 %v232, %v234
        %v275 = vmul.f32 %v233, %v235
        %v276 = vsub.f32 %v272, %v274
        %v277 = vsub.f32 %v273, %v275
        %v278 = vlog2.pop %v260
        %v279 = vmul.f32 %v278, 0.6931472
        %v280 = vlog2.pop %v261
        %v281 = vmul.f32 %v280, 0.6931472
        %v282 = vadd.f32 %v276, %v279
        %v283 = vadd.f32 %v277, %v281
        %v284 = vmul.f32 %v270, %v234
        %v285 = vmul.f32 %v271, %v235
        %v286 = vsel %vm250, %v284, 0.0
        %v287 = vsel %vm251, %v285, 0.0
        %v288 = vsel %vm250, %v270, 0.0
        %v289 = vsel %vm251, %v271, 0.0
        %v290 = vsel %vm250, %v234, 0.0
        %v291 = vsel %vm251, %v235, 0.0
        %v292 = vsel %vm250, %v282, 0.0
        %v293 = vsel %vm251, %v283, 0.0
        %v294 = vld [vmem:[%s219] sm:$0xff]
        %v295 = vadd.f32 %v286, %v287
        %v296 = vadd.f32 %v294, %v295
        %297 = vst [vmem:[%s219] sm:$0xff] %v296
        %s298 = scalar_lea.vmem %s219, 8 [#allocation7]
        %v299 = vld [vmem:[%s298] sm:$0xff]
        %v300 = vadd.f32 %v288, %v289
        %v301 = vadd.f32 %v299, %v300
        %302 = vst [vmem:[%s298] sm:$0xff] %v301
        %s303 = scalar_lea.vmem %s219, 16 [#allocation7]
        %v304 = vld [vmem:[%s303] sm:$0xff]
        %v305 = vadd.f32 %v290, %v291
        %v306 = vadd.f32 %v304, %v305
        %307 = vst [vmem:[%s303] sm:$0xff] %v306
        %s308 = scalar_lea.vmem %s219, 24 [#allocation7]
        %v309 = vld [vmem:[%s308] sm:$0xff]
        %v310 = vadd.f32 %v292, %v293
        %v311 = vadd.f32 %v309, %v310
        %312 = vst [vmem:[%s308] sm:$0xff] %v311
        %s313 = sand.u32 %s98, 1
        %s314 = scalar_lea.sflag [#allocation4], %s313
        %s315 = sand.u32 %s98, 1
        %s316 = smul.addr %s315, 32
        %s317 = scalar_lea.vmem [#allocation7], %s316
        // Predicated region
        $region41: #{tpu_custom_call.1} parent=27 // pred_check
          %p318 = pneg %p108
        $region42: #{tpu_custom_call.1} parent=27 // pred_check_branch
          %320 = sbr.rel (%p318) target = $region44
        $region43: #{tpu_custom_call.1} parent=27 // pred_region
          %s322 = ssub.s32 512, 512
          %323 = vsyncadd %s314, %s322
          %s324 = smul.addr %s26, 4
          %s325 = smul.addr %s324, 128
          %s326 = scalar_lea.hbm %s2, %s325
          %s327 = sshll.u32 %s317, 4
          %s328 = int_to_ptr.vmem [resolvable:$true] %s327
          %333 = dma.vmem_to_hbm [thread:$0]  %s328, 512, %s326, %s314, 128, 128, 8
        $region44: #{tpu_custom_call.1} parent=27 // pred_fallthru
          _
      $region28: #{tpu_custom_call.1} parent=5 // pred_fallthru
        _
      %p334 = scmp.le.s32.totalorder 2, %s17
      // Predicated region
      $region45: #{tpu_custom_call.1} parent=5 // pred_check
        %p335 = pneg %p334
      $region46: #{tpu_custom_call.1} parent=5 // pred_check_branch
        %337 = sbr.rel (%p335) target = $region48
      $region47: #{tpu_custom_call.1} parent=5 // pred_region
        %s338 = ssub.s32 %s17, 2
        // Predicated region
        $region49: #{tpu_custom_call.1} parent=47 // pred_check
          %p339 = pneg %p114
        $region50: #{tpu_custom_call.1} parent=47 // pred_check_branch
          %341 = sbr.rel (%p339) target = $region52
        $region51: #{tpu_custom_call.1} parent=47 // pred_region
          %s342 = sand.u32 %s99, 1
          %s343 = scalar_lea.sflag [#allocation4], %s342
          %s344 = sand.u32 %s99, 1
          %s345 = smul.addr %s344, 32
          %s346 = scalar_lea.vmem [#allocation7], %s345
          %347 = dma.done %s343, 512
        $region52: #{tpu_custom_call.1} parent=47 // pred_fallthru
          _
      $region48: #{tpu_custom_call.1} parent=5 // pred_fallthru
        _
    $region6: #{tpu_custom_call.1} parent=1 // loop_footer
      %s21 = sadd.s32 1, %s17
    $region7: #{tpu_custom_call.1} parent=1 // loop_footer_branch
      %16 = sbr.rel target = $region3
    $region8: #{tpu_custom_call.1} parent=1 // loop_exit
      _
    %348 = vsyncpa [#allocation3], 1
    %s349 = scalar_lea.sflag [#allocation3], 1
    %350 = vsyncpa %s349, 1
    %351 = vsyncpa [#allocation6], 1
    %s352 = scalar_lea.sflag [#allocation6], 1
    %353 = vsyncpa %s352, 1
    %354 = vsyncpa [#allocation4], 1
    %s355 = scalar_lea.sflag [#allocation4], 1
    %356 = vsyncpa %s355, 1

</llo_original>
